<compile_context>
chip_gen: v7x
topology: tpu7x:2x2x1
jax: 0.10.0
libtpu: 0.0.40
codegen_flags: <defaults>
</compile_context>

<pallas_src>
import functools

import jax
import jax.numpy as jnp
import numpy as np
from jax.experimental import pallas as pl
from jax.experimental.pallas import tpu as pltpu


def _round_up(x, m):
    return (x + m - 1) // m * m


def _pick_block_n(n, c, itemsize, vmem_budget_bytes=16 * 1024 * 1024):
    """Batch-tile size (multiple of 128), budgeted against scoped VMEM.

    Accounts for: the double-buffered natural-layout (TN, C) input tile with its
    128-lane VMEM padding, the f32 upcast copy, and ~6 (C, TN) f32 intermediates.
    Also guarantees >= 2 tiles when the batch allows it (v7x megacore split).
    """
    c_lane = _round_up(max(c, 1), 128)   # lane padding of the (TN, C) VMEM tile
    c_sub = _round_up(max(c, 1), 8)      # sublane extent of transposed f32 temps
    bytes_per_row = (2 * c_lane * itemsize   # double-buffered input tile
                     + 4 * c_lane            # f32 upcast copy
                     + 6 * 4 * c_sub         # transposed f32 intermediates
                     + 64)                   # per-sample rows (targets, w_t, out)
    by_vmem = (vmem_budget_bytes // bytes_per_row) // 128 * 128
    bn = max(128, min(by_vmem, 32 * 1024))
    if pl.cdiv(n, 128) >= 2:
        # At least two tiles -> the "parallel" axis can split across v7x's 2 TCs.
        bn = min(bn, _round_up(pl.cdiv(n, 2), 128))
    return int(max(128, min(bn, _round_up(n, 128))))


def _focal_loss_kernel(logits_ref, targets_ref, *rest, gamma, n_total, has_weight):
    # logits_ref : (TN, C) native dtype, natural (batch-major) layout
    # targets_ref: (1, TN) int32
    # wt_ref     : (1, TN) f32 per-sample class weight (only if has_weight)
    # out_ref    : (1, TN) f32 per-sample focal terms (0 for lanes past N)
    if has_weight:
        wt_ref, out_ref = rest
    else:
        (out_ref,) = rest

    # In-kernel (TN, C) -> (C, TN) transpose (XLU, otherwise idle here) so every
    # per-sample quantity downstream is a lane-dense (1, TN) row.
    logits = jnp.transpose(logits_ref[...].astype(jnp.float32))    # (C, TN) f32
    targets = targets_ref[...]                                      # (1, TN) i32

    c, tn = logits.shape

    # Target-class mask (bool, no f32 one-hot materialized).
    row = jax.lax.broadcasted_iota(jnp.int32, (c, tn), 0)
    tmask = row == targets                                          # (C, TN)

    # Numerically stable log-softmax pieces; reuse the shifted logits.
    m = jnp.max(logits, axis=0, keepdims=True)                      # (1, TN)
    shifted = logits - m                                            # (C, TN)
    sumexp = jnp.sum(jnp.exp(shifted), axis=0, keepdims=True)       # (1, TN)
    shifted_t = jnp.sum(jnp.where(tmask, shifted, 0.0), axis=0, keepdims=True)

    ce = jnp.log(sumexp) - shifted_t                                # (1, TN)
    if has_weight:
        ce = wt_ref[...] * ce
    pt = jnp.exp(-ce)
    one_minus_pt = jnp.maximum(1.0 - pt, 0.0)                       # clamp rounding negatives

    g_int = int(gamma)
    if float(g_int) == float(gamma) and 0 <= g_int <= 8:
        # Integer gamma -> VPU multiply chain (avoids exp/log on the EUP).
        mod = jnp.ones_like(one_minus_pt) if g_int == 0 else one_minus_pt
        for _ in range(max(g_int - 1, 0)):
            mod = mod * one_minus_pt
    else:
        mod = jnp.power(one_minus_pt, jnp.float32(gamma))

    focal = mod * ce                                                # (1, TN)

    # Mask lanes past the true batch size (ragged last tile reads stale VMEM).
    col = jax.lax.broadcasted_iota(jnp.int32, (1, tn), 1)
    valid = (pl.program_id(0) * tn + col) < n_total
    out_ref[...] = jnp.where(valid, focal, 0.0)


def focal_loss(logits, targets, weight=None, gamma=2.0, block_n=None):
    """Pallas TPU focal loss. logits: (N, C) float (any dtype); targets: (N,) int."""
    n, c = logits.shape
    targets_i32 = jnp.asarray(targets, jnp.int32)
    targets2d = targets_i32.reshape(1, n)

    itemsize = jnp.dtype(logits.dtype).itemsize
    if block_n is None:
        block_n = _pick_block_n(n, c, itemsize)
    num_tiles = pl.cdiv(n, block_n)

    has_weight = weight is not None
    args = [logits, targets2d]
    in_specs = [
        pl.BlockSpec((block_n, c), lambda i: (i, 0)),   # natural layout, contiguous DMA
        pl.BlockSpec((1, block_n), lambda i: (0, i)),   # targets (lane-dense)
    ]
    if has_weight:
        # Wrapper-side gather: per-sample class weight, lane-dense f32 row.
        w_t = jnp.asarray(weight, jnp.float32)[targets_i32].reshape(1, n)
        args.append(w_t)
        in_specs.append(pl.BlockSpec((1, block_n), lambda i: (0, i)))

    kernel = functools.partial(
        _focal_loss_kernel, gamma=float(gamma), n_total=n, has_weight=has_weight)

    per_sample = pl.pallas_call(
        kernel,
        out_shape=jax.ShapeDtypeStruct((1, n), jnp.float32),
        grid=(num_tiles,),
        in_specs=in_specs,
        out_specs=pl.BlockSpec((1, block_n), lambda i: (0, i)),
        compiler_params=pltpu.CompilerParams(
            dimension_semantics=("parallel",),
            vmem_limit_bytes=32 * 1024 * 1024,
        ),
    )(*args)

    # Tiny final reduction in plain JAX (masked lanes are already zero / dropped).
    return jnp.sum(per_sample) / jnp.float32(n)


def _focal_loss_ref(logits, targets, weight, gamma):
    logits = logits.astype(jnp.float32)
    logp = jax.nn.log_softmax(logits, axis=-1)
    n = logits.shape[0]
    logp_t = logp[jnp.arange(n), targets]
    w_t = weight[targets]
    ce = -w_t * logp_t
    pt = jnp.exp(-ce)
    return jnp.mean((1.0 - pt) ** gamma * ce)


if __name__ == "__main__":
    key = jax.random.PRNGKey(0)
    k1, k2, k3, k4, k5 = jax.random.split(key, 5)

    # Case 1: weighted, gamma=2 (integer fast path), single tile, auto block_n.
    N, C = 64, 16
    logits = jax.random.normal(k1, (N, C), jnp.float32)
    targets = jax.random.randint(k2, (N,), 0, C, jnp.int32)
    weight = 0.5 + jax.random.uniform(k3, (C,), jnp.float32)
    gamma = 2.0

    loss = jax.block_until_ready(focal_loss(logits, targets, weight=weight, gamma=gamma))
    ref = _focal_loss_ref(logits, targets, weight, gamma)
    np.testing.assert_allclose(np.asarray(loss), np.asarray(ref), rtol=1e-5, atol=1e-5)

    # Case 2: unweighted, fractional gamma, ragged batch across multiple tiles.
    N2, C2 = 300, 10
    logits2 = jax.random.normal(k4, (N2, C2), jnp.float32)
    targets2 = jax.random.randint(k5, (N2,), 0, C2, jnp.int32)
    weight2 = jnp.ones((C2,), jnp.float32)
    gamma2 = 1.5

    loss2 = jax.block_until_ready(
        focal_loss(logits2, targets2, weight=None, gamma=gamma2, block_n=128)
    )
    ref2 = _focal_loss_ref(logits2, targets2, weight2, gamma2)
    np.testing.assert_allclose(np.asarray(loss2), np.asarray(ref2), rtol=1e-5, atol=1e-5)

    print("KERNEL_OK")
</pallas_src>

<mosaic_0001>
module attributes {stable_mosaic.version = 11 : i64} {
  func.func @_focal_loss_kernel(%arg0: i32, %arg1: memref<128x16xf32, #tpu.memory_space<vmem>>, %arg2: memref<1x128xi32, #tpu.memory_space<vmem>>, %arg3: memref<1x128xf32, #tpu.memory_space<vmem>>, %arg4: memref<1x128xf32, #tpu.memory_space<vmem>>) attributes {dimension_semantics = [#tpu.dimension_semantics<parallel>], iteration_bounds = array<i64: 1>, scalar_prefetch = 0 : i64, scratch_operands = 0 : i64, tpu.core_type = #tpu.core_type<tc>, window_params = [{transform_indices = @transform_0, window_bounds = array<i64: 128, 16>}, {transform_indices = @transform_1, window_bounds = array<i64: 1, 128>}, {transform_indices = @transform_2, window_bounds = array<i64: 1, 128>}, {transform_indices = @transform_3, window_bounds = array<i64: 1, 128>}]} {
    %c0 = arith.constant 0 : index
    %c0_0 = arith.constant 0 : index
    %0 = vector.load %arg1[%c0, %c0_0] : memref<128x16xf32, #tpu.memory_space<vmem>>, vector<128x16xf32>
    %1 = tpu.transpose %0, [1, 0] : vector<128x16xf32> -> vector<16x128xf32>
    %c0_1 = arith.constant 0 : index
    %c0_2 = arith.constant 0 : index
    %2 = vector.load %arg2[%c0_1, %c0_2] : memref<1x128xi32, #tpu.memory_space<vmem>>, vector<1x128xi32>
    %3 = tpu.iota {dimensions = array<i32: 0>} : vector<16x128xi32>
    %4 = vector.broadcast %2 : vector<1x128xi32> to vector<16x128xi32>
    %5 = arith.cmpi eq, %3, %4 : vector<16x128xi32>
    %cst = arith.constant dense<0xFF800000> : vector<128xf32>
    %6 = vector.multi_reduction <maximumf>, %1, %cst [0] : vector<16x128xf32> to vector<128xf32>
    %7 = vector.shape_cast %6 : vector<128xf32> to vector<1x128xf32>
    %8 = vector.broadcast %7 : vector<1x128xf32> to vector<16x128xf32>
    %9 = arith.subf %1, %8 : vector<16x128xf32>
    %10 = math.exp %9 : vector<16x128xf32>
    %cst_3 = arith.constant dense<0.000000e+00> : vector<128xf32>
    %11 = vector.multi_reduction <add>, %10, %cst_3 [0] : vector<16x128xf32> to vector<128xf32>
    %12 = vector.shape_cast %11 : vector<128xf32> to vector<1x128xf32>
    %cst_4 = arith.constant 0.000000e+00 : f32
    %13 = vector.broadcast %cst_4 : f32 to vector<16x128xf32>
    %14 = arith.select %5, %9, %13 : vector<16x128xi1>, vector<16x128xf32>
    %cst_5 = arith.constant dense<0.000000e+00> : vector<128xf32>
    %15 = vector.multi_reduction <add>, %14, %cst_5 [0] : vector<16x128xf32> to vector<128xf32>
    %16 = vector.shape_cast %15 : vector<128xf32> to vector<1x128xf32>
    %17 = math.log %12 : vector<1x128xf32>
    %18 = arith.subf %17, %16 : vector<1x128xf32>
    %c0_6 = arith.constant 0 : index
    %c0_7 = arith.constant 0 : index
    %19 = vector.load %arg3[%c0_6, %c0_7] : memref<1x128xf32, #tpu.memory_space<vmem>>, vector<1x128xf32>
    %20 = arith.mulf %19, %18 : vector<1x128xf32>
    %cst_8 = arith.constant 0.000000e+00 : f32
    %21 = vector.broadcast %cst_8 : f32 to vector<1x128xf32>
    %22 = arith.subf %21, %20 : vector<1x128xf32>
    %23 = math.exp %22 : vector<1x128xf32>
    %cst_9 = arith.constant 1.000000e+00 : f32
    %24 = vector.broadcast %cst_9 : f32 to vector<1x128xf32>
    %25 = arith.subf %24, %23 : vector<1x128xf32>
    %cst_10 = arith.constant 0.000000e+00 : f32
    %26 = vector.broadcast %cst_10 : f32 to vector<1x128xf32>
    %27 = arith.maximumf %25, %26 : vector<1x128xf32>
    %28 = arith.mulf %27, %27 : vector<1x128xf32>
    %29 = arith.mulf %28, %20 : vector<1x128xf32>
    %30 = tpu.iota {dimensions = array<i32: 1>} : vector<1x128xi32>
    %c128_i32 = arith.constant 128 : i32
    %31 = arith.muli %arg0, %c128_i32 : i32
    %32 = vector.broadcast %31 : i32 to vector<1x128xi32>
    %33 = arith.addi %32, %30 : vector<1x128xi32>
    %c64_i32 = arith.constant 64 : i32
    %34 = vector.broadcast %c64_i32 : i32 to vector<1x128xi32>
    %35 = arith.cmpi slt, %33, %34 : vector<1x128xi32>
    %cst_11 = arith.constant 0.000000e+00 : f32
    %36 = vector.broadcast %cst_11 : f32 to vector<1x128xf32>
    %37 = arith.select %35, %29, %36 : vector<1x128xi1>, vector<1x128xf32>
    %c0_12 = arith.constant 0 : index
    %c0_13 = arith.constant 0 : index
    %38 = vector.load %arg4[%c0_12, %c0_13] : memref<1x128xf32, #tpu.memory_space<vmem>>, vector<1x128xf32>
    tpu.vector_store %arg4[%c0_12, %c0_13], %37 {strides = array<i32>} : memref<1x128xf32, #tpu.memory_space<vmem>>, vector<1x128xf32>,
    return
  }
  func.func @transform_0(%arg0: i32) -> (i32, i32) {
    %c0_i32 = arith.constant 0 : i32
    %c0_i32_0 = arith.constant 0 : i32
    return %arg0, %c0_i32 : i32, i32
  }
  func.func @transform_1(%arg0: i32) -> (i32, i32) {
    %c0_i32 = arith.constant 0 : i32
    %c0_i32_0 = arith.constant 0 : i32
    return %c0_i32, %arg0 : i32, i32
  }
  func.func @transform_2(%arg0: i32) -> (i32, i32) {
    %c0_i32 = arith.constant 0 : i32
    %c0_i32_0 = arith.constant 0 : i32
    return %c0_i32, %arg0 : i32, i32
  }
  func.func @transform_3(%arg0: i32) -> (i32, i32) {
    %c0_i32 = arith.constant 0 : i32
    %c0_i32_0 = arith.constant 0 : i32
    return %c0_i32, %arg0 : i32, i32
  }
}

</mosaic_0001>

<llo_original>
// kernel: tpu_custom_call.1
$region0: #{tpu_custom_call.1}
  #allocation0 [shape = 'u32[]', space=smem, size = 0x4, offset = 0x4, fixed_abs, tag = 'smem constant byte address 0x4 - core index']
  #allocation1 [shape = 'u32[144,128]{1,0:T(1,128)}', space=vmem, size = 0x12000, scoped, tag = 'internal scratch']
  %s0 = inlined_call_operand.vmem [shape: f32[64,16], index: 0, kind: input, shape index: {}]
  %s1 = inlined_call_operand.vmem [shape: s32[1,64], index: 1, kind: input, shape index: {}]
  %s2 = inlined_call_operand.vmem [shape: f32[1,64], index: 2, kind: input, shape index: {}]
  %s3 = inlined_call_operand.hbm [shape: f32[1,64], index: 3, kind: output, shape index: {}]
  %s4 = sld [smem:[#allocation0]]
  $region22: #{tpu_custom_call.1} parent=0
    _
  %s6 = ssub.s32 1, %s4
  %s7 = scalar_select 0, %s6, %s4
  $region1: #{tpu_custom_call.1} parent=0
    #allocation2 [shape = 'u8[512]{0}', space=vmem, size = 0x400, scoped, tag = 'output window, operand 0, single buffered']
    #allocation3 [shape = 's32[1]{0}', space=sflag, size = 0x4, scoped, tag = 'scoped memory for tpu_custom_call.1']
    %8 = vsyncpa [#allocation3], 0
    // Predicated region
    $region2: #{tpu_custom_call.1} parent=1 // pred_check
      _
    $region3: #{tpu_custom_call.1} parent=1 // pred_check_branch
      %10 = sbr.rel (0) target = $region5
    $region4: #{tpu_custom_call.1} parent=1 // pred_region
      _
    $region5: #{tpu_custom_call.1} parent=1 // pred_fallthru
      _
    // Predicated region
    $region6: #{tpu_custom_call.1} parent=1 // pred_check
      _
    $region7: #{tpu_custom_call.1} parent=1 // pred_check_branch
      %12 = sbr.rel (0) target = $region9
    $region8: #{tpu_custom_call.1} parent=1 // pred_region
      _
    $region9: #{tpu_custom_call.1} parent=1 // pred_fallthru
      _
    // Predicated region
    $region10: #{tpu_custom_call.1} parent=1 // pred_check
      _
    $region11: #{tpu_custom_call.1} parent=1 // pred_check_branch
      %14 = sbr.rel (0) target = $region13
    $region12: #{tpu_custom_call.1} parent=1 // pred_region
      _
    $region13: #{tpu_custom_call.1} parent=1 // pred_fallthru
      _
    %v15 = vld [vmem:[%s0] sm:$0xff]
    %v16 = vld [vmem:[%s0 + $0x8] sm:$0xff]
    %v17 = vld [vmem:[%s0 + $0x10] sm:$0xff]
    %v18 = vld [vmem:[%s0 + $0x18] sm:$0xff]
    %v19 = vld [vmem:[%s0 + $0x20] sm:$0xff]
    %v20 = vld [vmem:[%s0 + $0x28] sm:$0xff]
    %v21 = vld [vmem:[%s0 + $0x30] sm:$0xff]
    %v22 = vld [vmem:[%s0 + $0x38] sm:$0xff]
    %v23 = vld [vmem:[%s0 + $0x40] sm:$0xff]
    %v24 = vld [vmem:[%s0 + $0x48] sm:$0xff]
    %v25 = vld [vmem:[%s0 + $0x50] sm:$0xff]
    %v26 = vld [vmem:[%s0 + $0x58] sm:$0xff]
    %v27 = vld [vmem:[%s0 + $0x60] sm:$0xff]
    %v28 = vld [vmem:[%s0 + $0x68] sm:$0xff]
    %v29 = vld [vmem:[%s0 + $0x70] sm:$0xff]
    %v30 = vld [vmem:[%s0 + $0x78] sm:$0xff]
    %31 = vxpose.xlu0.b32.start [1/16] %v15, 128
    %32 = vxpose.xlu0.b32.cont [2/16] %v16, 128
    %33 = vxpose.xlu0.b32.cont [3/16] %v17, 128
    %34 = vxpose.xlu0.b32.cont [4/16] %v18, 128
    %35 = vxpose.xlu0.b32.cont [5/16] %v19, 128
    %36 = vxpose.xlu0.b32.cont [6/16] %v20, 128
    %37 = vxpose.xlu0.b32.cont [7/16] %v21, 128
    %38 = vxpose.xlu0.b32.cont [8/16] %v22, 128
    %39 = vxpose.xlu0.b32.cont [9/16] %v23, 128
    %40 = vxpose.xlu0.b32.cont [10/16] %v24, 128
    %41 = vxpose.xlu0.b32.cont [11/16] %v25, 128
    %42 = vxpose.xlu0.b32.cont [12/16] %v26, 128
    %43 = vxpose.xlu0.b32.cont [13/16] %v27, 128
    %44 = vxpose.xlu0.b32.cont [14/16] %v28, 128
    %45 = vxpose.xlu0.b32.cont [15/16] %v29, 128
    %46 = vxpose.xlu0.b32.end [16/16] %v30, 128
    %v47 = vpop.trf.xlu0
    %v48 = vpop.trf.xlu0
    %v49 = vpop.trf.xlu0
    %v50 = vpop.trf.xlu0
    %v51 = vpop.trf.xlu0
    %v52 = vpop.trf.xlu0
    %v53 = vpop.trf.xlu0
    %v54 = vpop.trf.xlu0
    %v55 = vpop.trf.xlu0
    %v56 = vpop.trf.xlu0
    %v57 = vpop.trf.xlu0
    %v58 = vpop.trf.xlu0
    %v59 = vpop.trf.xlu0
    %v60 = vpop.trf.xlu0
    %v61 = vpop.trf.xlu0
    %v62 = vpop.trf.xlu0
    %v63 = vld [vmem:[%s1] sm:$0x1]
    %v64 = vlaneseq
    %v65 = vshrl.u32 %v64, 7
    %v66 = vadd.s32 %v65, 8
    %v67 = vlaneseq
    %v68 = vshrl.u32 %v67, 7
    %v69 = vsub.s32 0, %v68
    %v70 = vrot.slane %v63, %v69
    %vm71 = vcmp.eq.s32.totalorder %v65, %v70
    %vm72 = vcmp.eq.s32.totalorder %v66, %v70
    %v73 = vmax.f32 %v47, %v48
    %v74 = vrot.slane %v73, 4
    %v75 = vmax.f32 %v73, %v74
    %v76 = vrot.slane %v75, 2
    %v77 = vmax.f32 %v75, %v76
    %v78 = vrot.slane %v77, 1
    %v79 = vmax.f32 %v77, %v78
    %v80 = vsub.f32 %v47, %v79
    %v81 = vsub.f32 %v48, %v79
    %v82 = vmul.f32 %v80, 1.442695
    %v83 = vpow.pop %v82
    %v84 = vmul.f32 %v81, 1.442695
    %v85 = vpow.pop %v84
    %v86 = vadd.f32 %v83, %v85
    %v87 = vrot.slane %v86, 4
    %v88 = vadd.f32 %v86, %v87
    %v89 = vrot.slane %v88, 2
    %v90 = vadd.f32 %v88, %v89
    %v91 = vrot.slane %v90, 1
    %v92 = vadd.f32 %v90, %v91
    %v93 = vsel %vm71, %v80, 0.0
    %v94 = vsel %vm72, %v81, 0.0
    %v95 = vadd.f32 %v93, %v94
    %v96 = vrot.slane %v95, 4
    %v97 = vadd.f32 %v95, %v96
    %v98 = vrot.slane %v97, 2
    %v99 = vadd.f32 %v97, %v98
    %v100 = vrot.slane %v99, 1
    %v101 = vadd.f32 %v99, %v100
    %v102 = vlog2.pop %v92
    %v103 = vmul.f32 %v102, 0.6931472
    %v104 = vsub.f32 %v103, %v101
    %v105 = vld [vmem:[%s2] sm:$0x1]
    %v106 = vmul.f32 %v105, %v104
    %v107 = vsub.f32 0.0, %v106
    %v108 = vmul.f32 %v107, 1.442695
    %v109 = vpow.pop %v108
    %v110 = vsub.f32 1.0, %v109
    %v111 = vmax.f32 %v110, 0.0
    %v112 = vmul.f32 %v111, %v111
    %v113 = vmul.f32 %v112, %v106
    %v114 = vlaneseq
    %v115 = vand.u32 %v114, 127
    %s116 = smul.u32 0, 128
    %v117 = vstv %s116
    %v118 = vadd.s32 %v117, %v115
    %vm119 = vcmp.lt.s32.totalorder %v118, 64
    %v120 = vsel %vm119, %v113, 0.0
    %121 = vst [vmem:[#allocation2] sm:$0x1] %v120
    // Predicated region
    $region14: #{tpu_custom_call.1} parent=1 // pred_check
      _
    $region15: #{tpu_custom_call.1} parent=1 // pred_check_branch
      %123 = sbr.rel (0) target = $region17
    $region16: #{tpu_custom_call.1} parent=1 // pred_region
      %s125 = ssub.s32 16, 16
      %126 = vsyncadd [#allocation3], %s125
      %s128 = sshll.u32 [#allocation2], 4
      %s129 = int_to_ptr.vmem [resolvable:$true] %s128
      %131 = dma.vmem_to_hbm [thread:$0]  %s129, 16, %s3, [#allocation3]
    $region17: #{tpu_custom_call.1} parent=1 // pred_fallthru
      _
    // Predicated region
    $region18: #{tpu_custom_call.1} parent=1 // pred_check
      _
    $region19: #{tpu_custom_call.1} parent=1 // pred_check_branch
      %133 = sbr.rel (0) target = $region21
    $region20: #{tpu_custom_call.1} parent=1 // pred_region
      %134 = dma.done [#allocation3], 16
    $region21: #{tpu_custom_call.1} parent=1 // pred_fallthru
      _
    %135 = vsyncpa [#allocation3], 1

</llo_original>
